<compile_context>
chip_gen: v7x
topology: tpu7x:2x2x1
jax: 0.10.0
libtpu: 0.0.40
codegen_flags: <defaults>
</compile_context>

<pallas_src>
import functools

import jax
import jax.numpy as jnp
from jax.experimental import pallas as pl
from jax.experimental.pallas import tpu as pltpu


def conv_dp_unit_kernel(x_ref, w1_ref, b1_ref, w2_ref, b2_ref, mask_ref, o_ref,
                        *, roll_amounts, with_bn_relu, matmul_dtype):
    # x_ref:  (Nb, Cin, HWp)   w1_ref: (TC, Cin)   b1_ref: (TC, 1)
    # w2_ref: (TC, 9)          b2_ref: (TC, 1)     mask_ref: (9, 1, HWp)
    # o_ref:  (Nb, TC, HWp)
    nb = o_ref.shape[0]
    w1 = w1_ref[...].astype(matmul_dtype)                    # (TC, Cin)
    b1 = b1_ref[...]                                         # (TC, 1)
    w2 = w2_ref[...]                                         # (TC, 9)
    b2 = b2_ref[...]                                         # (TC, 1)

    for n in range(nb):                                      # unrolled at trace time
        # --- conv1: 1x1 pointwise conv == channel matmul on the MXU ---
        x = x_ref[n].astype(matmul_dtype)                    # (Cin, HWp)
        y = jnp.dot(w1, x, preferred_element_type=jnp.float32)
        y = y + b1                                           # (TC, HWp)

        # --- conv2: depthwise 3x3, stride 1, pad 1, as 9 masked lane rolls ---
        # Per tap: (rolled y) * boundary-mask (sublane bcast) * per-channel
        # folded weight (lane bcast).  Center tap (k == 4, shift 0) seeds the
        # accumulator; its mask is all-ones inside the image (padded lanes are
        # sliced off in the wrapper), so the mask multiply is skipped there.
        acc = y * w2[:, 4:5]
        for k in range(9):
            if k == 4:
                continue
            t = pltpu.roll(y, roll_amounts[k], axis=1)
            acc = acc + (t * mask_ref[k]) * w2[:, k:k + 1]
        acc = acc + b2

        # --- ReLU (inference BN already folded into w2/b2) ---
        if with_bn_relu:
            acc = jnp.maximum(acc, 0.0)

        o_ref[n] = acc.astype(o_ref.dtype)


def _pick_cout_tile(cout):
    if cout <= 128:
        return cout
    for tc in (128, 64, 32, 16, 8):
        if cout % tc == 0:
            return tc
    return cout


def _pick_batch_tile(n, hwp, target_lanes=2048):
    nb = min(n, max(1, target_lanes // hwp))
    while n % nb != 0:
        nb -= 1
    return nb


def conv_dp_unit(x_nchw, w1, b1, w2, b2, scale, shift, *, with_bn_relu=True,
                 matmul_dtype=jnp.float32):
    """x_nchw: (N, Cin, H, W) f32.  w1: (Cout, Cin).  w2: (Cout, 9) row-major 3x3.
    scale/shift: folded eval-mode BN affine (per out-channel).
    matmul_dtype: set to jnp.bfloat16 on v6e/v7x for 2x MXU rate (accumulation
    stays f32); keep f32 on v5e (no bf16 VPU path).  Returns (N, Cout, H, W)."""
    N, Cin, H, W = x_nchw.shape
    Cout = w1.shape[0]
    HW = H * W
    HWp = ((HW + 127) // 128) * 128            # lane-dense (unmasked vst) output

    x = x_nchw.reshape(N, Cin, HW)             # free metadata reshape
    if HWp != HW:
        x = jnp.pad(x, ((0, 0), (0, 0), (0, HWp - HW)))

    # Fold inference-mode BN into the depthwise conv (per-channel affine).
    if with_bn_relu:
        w2f = w2 * scale[:, None]
        b2f = b2 * scale + shift
    else:
        w2f, b2f = w2, b2

    # Tiny per-tap zero-padding boundary masks (9, 1, HWp) + lane-roll amounts.
    hh = jnp.arange(H)[:, None]
    ww = jnp.arange(W)[None, :]
    masks, rolls = [], []
    for dh in (-1, 0, 1):
        for dw in (-1, 0, 1):
            valid = ((hh + dh >= 0) & (hh + dh < H) &
                     (ww + dw >= 0) & (ww + dw < W)).astype(jnp.float32)
            valid = valid.reshape(HW)
            if HWp != HW:
                valid = jnp.pad(valid, (0, HWp - HW))
            masks.append(valid)
            rolls.append(int((-(dh * W + dw)) % HWp))
    mask = jnp.stack(masks).reshape(9, 1, HWp)

    tc = _pick_cout_tile(Cout)
    nb = _pick_batch_tile(N, HWp)
    grid = (N // nb, Cout // tc)

    kernel = functools.partial(conv_dp_unit_kernel,
                               roll_amounts=tuple(rolls),
                               with_bn_relu=with_bn_relu,
                               matmul_dtype=matmul_dtype)

    # Advisory cost hint so XLA overlaps the (tiny) mask/weight prep with the kernel.
    cost = pl.CostEstimate(
        flops=int(N * Cout * HW * (2 * Cin + 29)),
        transcendentals=0,
        bytes_accessed=int(4 * (N * Cin * HWp + N * Cout * HWp
                                + Cout * Cin + Cout * 9 + 3 * Cout + 9 * HWp)),
    )

    out = pl.pallas_call(
        kernel,
        out_shape=jax.ShapeDtypeStruct((N, Cout, HWp), jnp.float32),
        grid_spec=pltpu.PrefetchScalarGridSpec(
            num_scalar_prefetch=0,
            grid=grid,
            in_specs=[
                pl.BlockSpec((nb, Cin, HWp), lambda g, c: (g, 0, 0)),
                pl.BlockSpec((tc, Cin), lambda g, c: (c, 0)),
                pl.BlockSpec((tc, 1), lambda g, c: (c, 0)),
                pl.BlockSpec((tc, 9), lambda g, c: (c, 0)),
                pl.BlockSpec((tc, 1), lambda g, c: (c, 0)),
                pl.BlockSpec((9, 1, HWp), lambda g, c: (0, 0, 0)),
            ],
            out_specs=pl.BlockSpec((nb, tc, HWp), lambda g, c: (g, c, 0)),
        ),
        compiler_params=pltpu.CompilerParams(
            dimension_semantics=("parallel", "parallel"),
            vmem_limit_bytes=32 * 1024 * 1024),
        cost_estimate=cost,
    )(x, w1, b1.reshape(Cout, 1), w2f, b2f.reshape(Cout, 1), mask)

    if HWp != HW:
        out = out[:, :, :HW]
    return out.reshape(N, Cout, H, W)                        # free reshape


def reference_nchw(x, w1_oihw, b1, w2_oihw, b2, gamma, beta, eps, with_bn_relu):
    """Plain-JAX reference matching PyTorch's ConvDPUnit (eval-mode BN)."""
    Cout = w1_oihw.shape[0]
    y = jax.lax.conv_general_dilated(
        x, w1_oihw, (1, 1), 'VALID',
        dimension_numbers=('NCHW', 'OIHW', 'NCHW'))
    y = y + b1[None, :, None, None]
    y = jax.lax.conv_general_dilated(
        y, w2_oihw, (1, 1), ((1, 1), (1, 1)),
        dimension_numbers=('NCHW', 'OIHW', 'NCHW'),
        feature_group_count=Cout)
    y = y + b2[None, :, None, None]
    if with_bn_relu:
        scale = gamma / jnp.sqrt(1.0 + eps)                  # running_var = 1
        shift = beta                                         # running_mean = 0
        y = y * scale[None, :, None, None] + shift[None, :, None, None]
        y = jnp.maximum(y, 0.0)
    return y


if __name__ == "__main__":
    N, Cin, Cout, H, W = 2, 4, 8, 16, 16
    eps = 1e-5
    with_bn_relu = True

    key = jax.random.PRNGKey(0)
    k1, k2, k3, k4, k5, k6, k7 = jax.random.split(key, 7)

    # PyTorch-shaped parameters (deterministic).
    w1_oihw = jax.random.normal(k1, (Cout, Cin, 1, 1), jnp.float32) * 0.1
    b1 = jax.random.normal(k2, (Cout,), jnp.float32) * 0.1
    w2_oihw = jax.random.normal(k3, (Cout, 1, 3, 3), jnp.float32) * 0.1
    b2 = jax.random.normal(k4, (Cout,), jnp.float32) * 0.1
    gamma = 1.0 + 0.1 * jax.random.normal(k5, (Cout,), jnp.float32)
    beta = 0.1 * jax.random.normal(k6, (Cout,), jnp.float32)

    x = jax.random.normal(k7, (N, Cin, H, W), jnp.float32)

    # Repack weights for the channel-major / flattened-spatial kernel.
    w1_k = w1_oihw[:, :, 0, 0]                               # (Cout, Cin)
    w2_k = w2_oihw[:, 0].reshape(Cout, 9)                    # row-major 3x3
    scale = gamma / jnp.sqrt(1.0 + eps)                      # folded eval-mode BN
    shift = beta

    out = conv_dp_unit(x, w1_k, b1, w2_k, b2, scale, shift,
                       with_bn_relu=with_bn_relu)
    out = jax.block_until_ready(out)

    ref = reference_nchw(x, w1_oihw, b1, w2_oihw, b2, gamma, beta, eps,
                         with_bn_relu)
    assert out.shape == (N, Cout, H, W)
    assert jnp.allclose(out, ref, rtol=1e-4, atol=1e-4), (
        float(jnp.max(jnp.abs(out - ref))))
    print("KERNEL_OK")
</pallas_src>

<mosaic_0001>
module attributes {stable_mosaic.version = 11 : i64} {
  func.func @conv_dp_unit_kernel(%arg0: i32, %arg1: i32, %arg2: memref<2x4x256xf32, #tpu.memory_space<vmem>>, %arg3: memref<8x4xf32, #tpu.memory_space<vmem>>, %arg4: memref<8x1xf32, #tpu.memory_space<vmem>>, %arg5: memref<8x9xf32, #tpu.memory_space<vmem>>, %arg6: memref<8x1xf32, #tpu.memory_space<vmem>>, %arg7: memref<9x1x256xf32, #tpu.memory_space<vmem>>, %arg8: memref<2x8x256xf32, #tpu.memory_space<vmem>>) attributes {dimension_semantics = [#tpu.dimension_semantics<parallel>, #tpu.dimension_semantics<parallel>], iteration_bounds = array<i64: 1, 1>, scalar_prefetch = 0 : i64, scratch_operands = 0 : i64, tpu.core_type = #tpu.core_type<tc>, window_params = [{transform_indices = @transform_0, window_bounds = array<i64: 2, 4, 256>}, {transform_indices = @transform_1, window_bounds = array<i64: 8, 4>}, {transform_indices = @transform_2, window_bounds = array<i64: 8, 1>}, {transform_indices = @transform_3, window_bounds = array<i64: 8, 9>}, {transform_indices = @transform_4, window_bounds = array<i64: 8, 1>}, {pipeline_mode = #tpu.pipeline_mode<synchronous>, transform_indices = @transform_5, window_bounds = array<i64: 9, 1, 256>}, {transform_indices = @transform_6, window_bounds = array<i64: 2, 8, 256>}]} {
    %c0 = arith.constant 0 : index
    %c0_0 = arith.constant 0 : index
    %0 = vector.load %arg3[%c0, %c0_0] : memref<8x4xf32, #tpu.memory_space<vmem>>, vector<8x4xf32>
    %c0_1 = arith.constant 0 : index
    %c0_2 = arith.constant 0 : index
    %1 = vector.load %arg4[%c0_1, %c0_2] : memref<8x1xf32, #tpu.memory_space<vmem>>, vector<8x1xf32>
    %c0_3 = arith.constant 0 : index
    %c0_4 = arith.constant 0 : index
    %2 = vector.load %arg5[%c0_3, %c0_4] : memref<8x9xf32, #tpu.memory_space<vmem>>, vector<8x9xf32>
    %c0_5 = arith.constant 0 : index
    %c0_6 = arith.constant 0 : index
    %3 = vector.load %arg6[%c0_5, %c0_6] : memref<8x1xf32, #tpu.memory_space<vmem>>, vector<8x1xf32>
    %c0_7 = arith.constant 0 : index
    %c0_8 = arith.constant 0 : index
    %c0_9 = arith.constant 0 : index
    %4 = vector.load %arg2[%c0_7, %c0_8, %c0_9] : memref<2x4x256xf32, #tpu.memory_space<vmem>>, vector<1x4x256xf32>
    %5 = vector.shape_cast %4 : vector<1x4x256xf32> to vector<4x256xf32>
    %cst = arith.constant dense<0.000000e+00> : vector<8x256xf32>
    %6 = tpu.matmul %0, %5, %cst {dimension_numbers = #tpu.dot_dimension_numbers<[1], [0], [0], [1], [0, 0, 1, 1], [], []>} : vector<8x4xf32>, vector<4x256xf32>, vector<8x256xf32> -> vector<8x256xf32>
    %7 = vector.broadcast %1 : vector<8x1xf32> to vector<8x256xf32>
    %8 = arith.addf %6, %7 : vector<8x256xf32>
    %9 = vector.extract_strided_slice %2 {offsets = [0, 4], sizes = [8, 1], strides = [1, 1]} : vector<8x9xf32> to vector<8x1xf32>
    %10 = vector.broadcast %9 : vector<8x1xf32> to vector<8x256xf32>
    %11 = arith.mulf %8, %10 : vector<8x256xf32>
    %c17_i32 = arith.constant 17 : i32
    %12 = tpu.dynamic_rotate %8 by %c17_i32 dim 1 : vector<8x256xf32>, i32 -> vector<8x256xf32>
    %c0_10 = arith.constant 0 : index
    %c0_11 = arith.constant 0 : index
    %c0_12 = arith.constant 0 : index
    %13 = vector.load %arg7[%c0_10, %c0_11, %c0_12] : memref<9x1x256xf32, #tpu.memory_space<vmem>>, vector<1x1x256xf32>
    %14 = vector.shape_cast %13 : vector<1x1x256xf32> to vector<1x256xf32>
    %15 = vector.broadcast %14 : vector<1x256xf32> to vector<8x256xf32>
    %16 = arith.mulf %12, %15 : vector<8x256xf32>
    %17 = vector.extract_strided_slice %2 {offsets = [0, 0], sizes = [8, 1], strides = [1, 1]} : vector<8x9xf32> to vector<8x1xf32>
    %18 = vector.broadcast %17 : vector<8x1xf32> to vector<8x256xf32>
    %19 = arith.mulf %16, %18 : vector<8x256xf32>
    %20 = arith.addf %11, %19 : vector<8x256xf32>
    %c16_i32 = arith.constant 16 : i32
    %21 = tpu.dynamic_rotate %8 by %c16_i32 dim 1 : vector<8x256xf32>, i32 -> vector<8x256xf32>
    %c1 = arith.constant 1 : index
    %c0_13 = arith.constant 0 : index
    %c0_14 = arith.constant 0 : index
    %22 = vector.load %arg7[%c1, %c0_13, %c0_14] : memref<9x1x256xf32, #tpu.memory_space<vmem>>, vector<1x1x256xf32>
    %23 = vector.shape_cast %22 : vector<1x1x256xf32> to vector<1x256xf32>
    %24 = vector.broadcast %23 : vector<1x256xf32> to vector<8x256xf32>
    %25 = arith.mulf %21, %24 : vector<8x256xf32>
    %26 = vector.extract_strided_slice %2 {offsets = [0, 1], sizes = [8, 1], strides = [1, 1]} : vector<8x9xf32> to vector<8x1xf32>
    %27 = vector.broadcast %26 : vector<8x1xf32> to vector<8x256xf32>
    %28 = arith.mulf %25, %27 : vector<8x256xf32>
    %29 = arith.addf %20, %28 : vector<8x256xf32>
    %c15_i32 = arith.constant 15 : i32
    %30 = tpu.dynamic_rotate %8 by %c15_i32 dim 1 : vector<8x256xf32>, i32 -> vector<8x256xf32>
    %c2 = arith.constant 2 : index
    %c0_15 = arith.constant 0 : index
    %c0_16 = arith.constant 0 : index
    %31 = vector.load %arg7[%c2, %c0_15, %c0_16] : memref<9x1x256xf32, #tpu.memory_space<vmem>>, vector<1x1x256xf32>
    %32 = vector.shape_cast %31 : vector<1x1x256xf32> to vector<1x256xf32>
    %33 = vector.broadcast %32 : vector<1x256xf32> to vector<8x256xf32>
    %34 = arith.mulf %30, %33 : vector<8x256xf32>
    %35 = vector.extract_strided_slice %2 {offsets = [0, 2], sizes = [8, 1], strides = [1, 1]} : vector<8x9xf32> to vector<8x1xf32>
    %36 = vector.broadcast %35 : vector<8x1xf32> to vector<8x256xf32>
    %37 = arith.mulf %34, %36 : vector<8x256xf32>
    %38 = arith.addf %29, %37 : vector<8x256xf32>
    %c1_i32 = arith.constant 1 : i32
    %39 = tpu.dynamic_rotate %8 by %c1_i32 dim 1 : vector<8x256xf32>, i32 -> vector<8x256xf32>
    %c3 = arith.constant 3 : index
    %c0_17 = arith.constant 0 : index
    %c0_18 = arith.constant 0 : index
    %40 = vector.load %arg7[%c3, %c0_17, %c0_18] : memref<9x1x256xf32, #tpu.memory_space<vmem>>, vector<1x1x256xf32>
    %41 = vector.shape_cast %40 : vector<1x1x256xf32> to vector<1x256xf32>
    %42 = vector.broadcast %41 : vector<1x256xf32> to vector<8x256xf32>
    %43 = arith.mulf %39, %42 : vector<8x256xf32>
    %44 = vector.extract_strided_slice %2 {offsets = [0, 3], sizes = [8, 1], strides = [1, 1]} : vector<8x9xf32> to vector<8x1xf32>
    %45 = vector.broadcast %44 : vector<8x1xf32> to vector<8x256xf32>
    %46 = arith.mulf %43, %45 : vector<8x256xf32>
    %47 = arith.addf %38, %46 : vector<8x256xf32>
    %c255_i32 = arith.constant 255 : i32
    %48 = tpu.dynamic_rotate %8 by %c255_i32 dim 1 : vector<8x256xf32>, i32 -> vector<8x256xf32>
    %c5 = arith.constant 5 : index
    %c0_19 = arith.constant 0 : index
    %c0_20 = arith.constant 0 : index
    %49 = vector.load %arg7[%c5, %c0_19, %c0_20] : memref<9x1x256xf32, #tpu.memory_space<vmem>>, vector<1x1x256xf32>
    %50 = vector.shape_cast %49 : vector<1x1x256xf32> to vector<1x256xf32>
    %51 = vector.broadcast %50 : vector<1x256xf32> to vector<8x256xf32>
    %52 = arith.mulf %48, %51 : vector<8x256xf32>
    %53 = vector.extract_strided_slice %2 {offsets = [0, 5], sizes = [8, 1], strides = [1, 1]} : vector<8x9xf32> to vector<8x1xf32>
    %54 = vector.broadcast %53 : vector<8x1xf32> to vector<8x256xf32>
    %55 = arith.mulf %52, %54 : vector<8x256xf32>
    %56 = arith.addf %47, %55 : vector<8x256xf32>
    %c241_i32 = arith.constant 241 : i32
    %57 = tpu.dynamic_rotate %8 by %c241_i32 dim 1 : vector<8x256xf32>, i32 -> vector<8x256xf32>
    %c6 = arith.constant 6 : index
    %c0_21 = arith.constant 0 : index
    %c0_22 = arith.constant 0 : index
    %58 = vector.load %arg7[%c6, %c0_21, %c0_22] : memref<9x1x256xf32, #tpu.memory_space<vmem>>, vector<1x1x256xf32>
    %59 = vector.shape_cast %58 : vector<1x1x256xf32> to vector<1x256xf32>
    %60 = vector.broadcast %59 : vector<1x256xf32> to vector<8x256xf32>
    %61 = arith.mulf %57, %60 : vector<8x256xf32>
    %62 = vector.extract_strided_slice %2 {offsets = [0, 6], sizes = [8, 1], strides = [1, 1]} : vector<8x9xf32> to vector<8x1xf32>
    %63 = vector.broadcast %62 : vector<8x1xf32> to vector<8x256xf32>
    %64 = arith.mulf %61, %63 : vector<8x256xf32>
    %65 = arith.addf %56, %64 : vector<8x256xf32>
    %c240_i32 = arith.constant 240 : i32
    %66 = tpu.dynamic_rotate %8 by %c240_i32 dim 1 : vector<8x256xf32>, i32 -> vector<8x256xf32>
    %c7 = arith.constant 7 : index
    %c0_23 = arith.constant 0 : index
    %c0_24 = arith.constant 0 : index
    %67 = vector.load %arg7[%c7, %c0_23, %c0_24] : memref<9x1x256xf32, #tpu.memory_space<vmem>>, vector<1x1x256xf32>
    %68 = vector.shape_cast %67 : vector<1x1x256xf32> to vector<1x256xf32>
    %69 = vector.broadcast %68 : vector<1x256xf32> to vector<8x256xf32>
    %70 = arith.mulf %66, %69 : vector<8x256xf32>
    %71 = vector.extract_strided_slice %2 {offsets = [0, 7], sizes = [8, 1], strides = [1, 1]} : vector<8x9xf32> to vector<8x1xf32>
    %72 = vector.broadcast %71 : vector<8x1xf32> to vector<8x256xf32>
    %73 = arith.mulf %70, %72 : vector<8x256xf32>
    %74 = arith.addf %65, %73 : vector<8x256xf32>
    %c239_i32 = arith.constant 239 : i32
    %75 = tpu.dynamic_rotate %8 by %c239_i32 dim 1 : vector<8x256xf32>, i32 -> vector<8x256xf32>
    %c8 = arith.constant 8 : index
    %c0_25 = arith.constant 0 : index
    %c0_26 = arith.constant 0 : index
    %76 = vector.load %arg7[%c8, %c0_25, %c0_26] : memref<9x1x256xf32, #tpu.memory_space<vmem>>, vector<1x1x256xf32>
    %77 = vector.shape_cast %76 : vector<1x1x256xf32> to vector<1x256xf32>
    %78 = vector.broadcast %77 : vector<1x256xf32> to vector<8x256xf32>
    %79 = arith.mulf %75, %78 : vector<8x256xf32>
    %80 = vector.extract_strided_slice %2 {offsets = [0, 8], sizes = [8, 1], strides = [1, 1]} : vector<8x9xf32> to vector<8x1xf32>
    %81 = vector.broadcast %80 : vector<8x1xf32> to vector<8x256xf32>
    %82 = arith.mulf %79, %81 : vector<8x256xf32>
    %83 = arith.addf %74, %82 : vector<8x256xf32>
    %84 = vector.broadcast %3 : vector<8x1xf32> to vector<8x256xf32>
    %85 = arith.addf %83, %84 : vector<8x256xf32>
    %cst_27 = arith.constant 0.000000e+00 : f32
    %86 = vector.broadcast %cst_27 : f32 to vector<8x256xf32>
    %87 = arith.maximumf %85, %86 : vector<8x256xf32>
    %c0_28 = arith.constant 0 : index
    %c0_29 = arith.constant 0 : index
    %c0_30 = arith.constant 0 : index
    %88 = vector.load %arg8[%c0_28, %c0_29, %c0_30] : memref<2x8x256xf32, #tpu.memory_space<vmem>>, vector<1x8x256xf32>
    %89 = vector.shape_cast %88 : vector<1x8x256xf32> to vector<8x256xf32>
    %90 = vector.shape_cast %87 : vector<8x256xf32> to vector<1x8x256xf32>
    tpu.vector_store %arg8[%c0_28, %c0_29, %c0_30], %90 {strides = array<i32>} : memref<2x8x256xf32, #tpu.memory_space<vmem>>, vector<1x8x256xf32>,
    %c1_31 = arith.constant 1 : index
    %c0_32 = arith.constant 0 : index
    %c0_33 = arith.constant 0 : index
    %91 = vector.load %arg2[%c1_31, %c0_32, %c0_33] : memref<2x4x256xf32, #tpu.memory_space<vmem>>, vector<1x4x256xf32>
    %92 = vector.shape_cast %91 : vector<1x4x256xf32> to vector<4x256xf32>
    %cst_34 = arith.constant dense<0.000000e+00> : vector<8x256xf32>
    %93 = tpu.matmul %0, %92, %cst_34 {dimension_numbers = #tpu.dot_dimension_numbers<[1], [0], [0], [1], [0, 0, 1, 1], [], []>} : vector<8x4xf32>, vector<4x256xf32>, vector<8x256xf32> -> vector<8x256xf32>
    %94 = vector.broadcast %1 : vector<8x1xf32> to vector<8x256xf32>
    %95 = arith.addf %93, %94 : vector<8x256xf32>
    %96 = vector.extract_strided_slice %2 {offsets = [0, 4], sizes = [8, 1], strides = [1, 1]} : vector<8x9xf32> to vector<8x1xf32>
    %97 = vector.broadcast %96 : vector<8x1xf32> to vector<8x256xf32>
    %98 = arith.mulf %95, %97 : vector<8x256xf32>
    %c17_i32_35 = arith.constant 17 : i32
    %99 = tpu.dynamic_rotate %95 by %c17_i32_35 dim 1 : vector<8x256xf32>, i32 -> vector<8x256xf32>
    %c0_36 = arith.constant 0 : index
    %c0_37 = arith.constant 0 : index
    %c0_38 = arith.constant 0 : index
    %100 = vector.load %arg7[%c0_36, %c0_37, %c0_38] : memref<9x1x256xf32, #tpu.memory_space<vmem>>, vector<1x1x256xf32>
    %101 = vector.shape_cast %100 : vector<1x1x256xf32> to vector<1x256xf32>
    %102 = vector.broadcast %101 : vector<1x256xf32> to vector<8x256xf32>
    %103 = arith.mulf %99, %102 : vector<8x256xf32>
    %104 = vector.extract_strided_slice %2 {offsets = [0, 0], sizes = [8, 1], strides = [1, 1]} : vector<8x9xf32> to vector<8x1xf32>
    %105 = vector.broadcast %104 : vector<8x1xf32> to vector<8x256xf32>
    %106 = arith.mulf %103, %105 : vector<8x256xf32>
    %107 = arith.addf %98, %106 : vector<8x256xf32>
    %c16_i32_39 = arith.constant 16 : i32
    %108 = tpu.dynamic_rotate %95 by %c16_i32_39 dim 1 : vector<8x256xf32>, i32 -> vector<8x256xf32>
    %c1_40 = arith.constant 1 : index
    %c0_41 = arith.constant 0 : index
    %c0_42 = arith.constant 0 : index
    %109 = vector.load %arg7[%c1_40, %c0_41, %c0_42] : memref<9x1x256xf32, #tpu.memory_space<vmem>>, vector<1x1x256xf32>
    %110 = vector.shape_cast %109 : vector<1x1x256xf32> to vector<1x256xf32>
    %111 = vector.broadcast %110 : vector<1x256xf32> to vector<8x256xf32>
    %112 = arith.mulf %108, %111 : vector<8x256xf32>
    %113 = vector.extract_strided_slice %2 {offsets = [0, 1], sizes = [8, 1], strides = [1, 1]} : vector<8x9xf32> to vector<8x1xf32>
    %114 = vector.broadcast %113 : vector<8x1xf32> to vector<8x256xf32>
    %115 = arith.mulf %112, %114 : vector<8x256xf32>
    %116 = arith.addf %107, %115 : vector<8x256xf32>
    %c15_i32_43 = arith.constant 15 : i32
    %117 = tpu.dynamic_rotate %95 by %c15_i32_43 dim 1 : vector<8x256xf32>, i32 -> vector<8x256xf32>
    %c2_44 = arith.constant 2 : index
    %c0_45 = arith.constant 0 : index
    %c0_46 = arith.constant 0 : index
    %118 = vector.load %arg7[%c2_44, %c0_45, %c0_46] : memref<9x1x256xf32, #tpu.memory_space<vmem>>, vector<1x1x256xf32>
    %119 = vector.shape_cast %118 : vector<1x1x256xf32> to vector<1x256xf32>
    %120 = vector.broadcast %119 : vector<1x256xf32> to vector<8x256xf32>
    %121 = arith.mulf %117, %120 : vector<8x256xf32>
    %122 = vector.extract_strided_slice %2 {offsets = [0, 2], sizes = [8, 1], strides = [1, 1]} : vector<8x9xf32> to vector<8x1xf32>
    %123 = vector.broadcast %122 : vector<8x1xf32> to vector<8x256xf32>
    %124 = arith.mulf %121, %123 : vector<8x256xf32>
    %125 = arith.addf %116, %124 : vector<8x256xf32>
    %c1_i32_47 = arith.constant 1 : i32
    %126 = tpu.dynamic_rotate %95 by %c1_i32_47 dim 1 : vector<8x256xf32>, i32 -> vector<8x256xf32>
    %c3_48 = arith.constant 3 : index
    %c0_49 = arith.constant 0 : index
    %c0_50 = arith.constant 0 : index
    %127 = vector.load %arg7[%c3_48, %c0_49, %c0_50] : memref<9x1x256xf32, #tpu.memory_space<vmem>>, vector<1x1x256xf32>
    %128 = vector.shape_cast %127 : vector<1x1x256xf32> to vector<1x256xf32>
    %129 = vector.broadcast %128 : vector<1x256xf32> to vector<8x256xf32>
    %130 = arith.mulf %126, %129 : vector<8x256xf32>
    %131 = vector.extract_strided_slice %2 {offsets = [0, 3], sizes = [8, 1], strides = [1, 1]} : vector<8x9xf32> to vector<8x1xf32>
    %132 = vector.broadcast %131 : vector<8x1xf32> to vector<8x256xf32>
    %133 = arith.mulf %130, %132 : vector<8x256xf32>
    %134 = arith.addf %125, %133 : vector<8x256xf32>
    %c255_i32_51 = arith.constant 255 : i32
    %135 = tpu.dynamic_rotate %95 by %c255_i32_51 dim 1 : vector<8x256xf32>, i32 -> vector<8x256xf32>
    %c5_52 = arith.constant 5 : index
    %c0_53 = arith.constant 0 : index
    %c0_54 = arith.constant 0 : index
    %136 = vector.load %arg7[%c5_52, %c0_53, %c0_54] : memref<9x1x256xf32, #tpu.memory_space<vmem>>, vector<1x1x256xf32>
    %137 = vector.shape_cast %136 : vector<1x1x256xf32> to vector<1x256xf32>
    %138 = vector.broadcast %137 : vector<1x256xf32> to vector<8x256xf32>
    %139 = arith.mulf %135, %138 : vector<8x256xf32>
    %140 = vector.extract_strided_slice %2 {offsets = [0, 5], sizes = [8, 1], strides = [1, 1]} : vector<8x9xf32> to vector<8x1xf32>
    %141 = vector.broadcast %140 : vector<8x1xf32> to vector<8x256xf32>
    %142 = arith.mulf %139, %141 : vector<8x256xf32>
    %143 = arith.addf %134, %142 : vector<8x256xf32>
    %c241_i32_55 = arith.constant 241 : i32
    %144 = tpu.dynamic_rotate %95 by %c241_i32_55 dim 1 : vector<8x256xf32>, i32 -> vector<8x256xf32>
    %c6_56 = arith.constant 6 : index
    %c0_57 = arith.constant 0 : index
    %c0_58 = arith.constant 0 : index
    %145 = vector.load %arg7[%c6_56, %c0_57, %c0_58] : memref<9x1x256xf32, #tpu.memory_space<vmem>>, vector<1x1x256xf32>
    %146 = vector.shape_cast %145 : vector<1x1x256xf32> to vector<1x256xf32>
    %147 = vector.broadcast %146 : vector<1x256xf32> to vector<8x256xf32>
    %148 = arith.mulf %144, %147 : vector<8x256xf32>
    %149 = vector.extract_strided_slice %2 {offsets = [0, 6], sizes = [8, 1], strides = [1, 1]} : vector<8x9xf32> to vector<8x1xf32>
    %150 = vector.broadcast %149 : vector<8x1xf32> to vector<8x256xf32>
    %151 = arith.mulf %148, %150 : vector<8x256xf32>
    %152 = arith.addf %143, %151 : vector<8x256xf32>
    %c240_i32_59 = arith.constant 240 : i32
    %153 = tpu.dynamic_rotate %95 by %c240_i32_59 dim 1 : vector<8x256xf32>, i32 -> vector<8x256xf32>
    %c7_60 = arith.constant 7 : index
    %c0_61 = arith.constant 0 : index
    %c0_62 = arith.constant 0 : index
    %154 = vector.load %arg7[%c7_60, %c0_61, %c0_62] : memref<9x1x256xf32, #tpu.memory_space<vmem>>, vector<1x1x256xf32>
    %155 = vector.shape_cast %154 : vector<1x1x256xf32> to vector<1x256xf32>
    %156 = vector.broadcast %155 : vector<1x256xf32> to vector<8x256xf32>
    %157 = arith.mulf %153, %156 : vector<8x256xf32>
    %158 = vector.extract_strided_slice %2 {offsets = [0, 7], sizes = [8, 1], strides = [1, 1]} : vector<8x9xf32> to vector<8x1xf32>
    %159 = vector.broadcast %158 : vector<8x1xf32> to vector<8x256xf32>
    %160 = arith.mulf %157, %159 : vector<8x256xf32>
    %161 = arith.addf %152, %160 : vector<8x256xf32>
    %c239_i32_63 = arith.constant 239 : i32
    %162 = tpu.dynamic_rotate %95 by %c239_i32_63 dim 1 : vector<8x256xf32>, i32 -> vector<8x256xf32>
    %c8_64 = arith.constant 8 : index
    %c0_65 = arith.constant 0 : index
    %c0_66 = arith.constant 0 : index
    %163 = vector.load %arg7[%c8_64, %c0_65, %c0_66] : memref<9x1x256xf32, #tpu.memory_space<vmem>>, vector<1x1x256xf32>
    %164 = vector.shape_cast %163 : vector<1x1x256xf32> to vector<1x256xf32>
    %165 = vector.broadcast %164 : vector<1x256xf32> to vector<8x256xf32>
    %166 = arith.mulf %162, %165 : vector<8x256xf32>
    %167 = vector.extract_strided_slice %2 {offsets = [0, 8], sizes = [8, 1], strides = [1, 1]} : vector<8x9xf32> to vector<8x1xf32>
    %168 = vector.broadcast %167 : vector<8x1xf32> to vector<8x256xf32>
    %169 = arith.mulf %166, %168 : vector<8x256xf32>
    %170 = arith.addf %161, %169 : vector<8x256xf32>
    %171 = vector.broadcast %3 : vector<8x1xf32> to vector<8x256xf32>
    %172 = arith.addf %170, %171 : vector<8x256xf32>
    %cst_67 = arith.constant 0.000000e+00 : f32
    %173 = vector.broadcast %cst_67 : f32 to vector<8x256xf32>
    %174 = arith.maximumf %172, %173 : vector<8x256xf32>
    %c1_68 = arith.constant 1 : index
    %c0_69 = arith.constant 0 : index
    %c0_70 = arith.constant 0 : index
    %175 = vector.load %arg8[%c1_68, %c0_69, %c0_70] : memref<2x8x256xf32, #tpu.memory_space<vmem>>, vector<1x8x256xf32>
    %176 = vector.shape_cast %175 : vector<1x8x256xf32> to vector<8x256xf32>
    %177 = vector.shape_cast %174 : vector<8x256xf32> to vector<1x8x256xf32>
    tpu.vector_store %arg8[%c1_68, %c0_69, %c0_70], %177 {strides = array<i32>} : memref<2x8x256xf32, #tpu.memory_space<vmem>>, vector<1x8x256xf32>,
    return
  }
  func.func @transform_0(%arg0: i32, %arg1: i32) -> (i32, i32, i32) {
    %c0_i32 = arith.constant 0 : i32
    %c0_i32_0 = arith.constant 0 : i32
    %c0_i32_1 = arith.constant 0 : i32
    return %arg0, %c0_i32, %c0_i32_0 : i32, i32, i32
  }
  func.func @transform_1(%arg0: i32, %arg1: i32) -> (i32, i32) {
    %c0_i32 = arith.constant 0 : i32
    %c0_i32_0 = arith.constant 0 : i32
    return %arg1, %c0_i32 : i32, i32
  }
  func.func @transform_2(%arg0: i32, %arg1: i32) -> (i32, i32) {
    %c0_i32 = arith.constant 0 : i32
    %c0_i32_0 = arith.constant 0 : i32
    return %arg1, %c0_i32 : i32, i32
  }
  func.func @transform_3(%arg0: i32, %arg1: i32) -> (i32, i32) {
    %c0_i32 = arith.constant 0 : i32
    %c0_i32_0 = arith.constant 0 : i32
    return %arg1, %c0_i32 : i32, i32
  }
  func.func @transform_4(%arg0: i32, %arg1: i32) -> (i32, i32) {
    %c0_i32 = arith.constant 0 : i32
    %c0_i32_0 = arith.constant 0 : i32
    return %arg1, %c0_i32 : i32, i32
  }
  func.func @transform_5(%arg0: i32, %arg1: i32) -> (i32, i32, i32) {
    %c0_i32 = arith.constant 0 : i32
    %c0_i32_0 = arith.constant 0 : i32
    %c0_i32_1 = arith.constant 0 : i32
    %c0_i32_2 = arith.constant 0 : i32
    return %c0_i32, %c0_i32_0, %c0_i32_1 : i32, i32, i32
  }
  func.func @transform_6(%arg0: i32, %arg1: i32) -> (i32, i32, i32) {
    %c0_i32 = arith.constant 0 : i32
    %c0_i32_0 = arith.constant 0 : i32
    return %arg0, %arg1, %c0_i32 : i32, i32, i32
  }
}

</mosaic_0001>

<llo_original>
// kernel: tpu_custom_call.1
$region0: #{tpu_custom_call.1}
  #allocation0 [shape = 'u32[]', space=smem, size = 0x4, offset = 0x4, fixed_abs, tag = 'smem constant byte address 0x4 - core index']
  #allocation1 [shape = 'u32[144,128]{1,0:T(1,128)}', space=vmem, size = 0x12000, scoped, tag = 'internal scratch']
  %s0 = inlined_call_operand.vmem [shape: f32[2,4,256], index: 0, kind: input, shape index: {}]
  %s1 = inlined_call_operand.vmem [shape: f32[8,4], index: 1, kind: input, shape index: {}]
  %s2 = inlined_call_operand.vmem [shape: f32[8,1], index: 2, kind: input, shape index: {}]
  %s3 = inlined_call_operand.hbm [shape: f32[8,9], index: 3, kind: input, shape index: {}]
  %s4 = inlined_call_operand.vmem [shape: f32[8,1], index: 4, kind: input, shape index: {}]
  %s5 = inlined_call_operand.vmem [shape: f32[9,1,256], index: 5, kind: input, shape index: {}]
  %s6 = inlined_call_operand.hbm [shape: f32[2,8,256], index: 6, kind: output, shape index: {}]
  %s7 = sld [smem:[#allocation0]]
  $region38: #{tpu_custom_call.1} parent=0
    _
  %s9 = ssub.s32 1, %s7
  %s10 = scalar_select 0, %s9, %s7
  $region1: #{tpu_custom_call.1} parent=0
    #allocation2 [shape = 'u8[4096]{0}', space=vmem, size = 0x1000, scoped, tag = 'input window, operand 3, single buffered']
    #allocation3 [shape = 's32[1]{0}', space=sflag, size = 0x4, scoped, tag = 'scoped memory for tpu_custom_call.1']
    #allocation4 [shape = 's32[1]{0}', space=sflag, size = 0x4, scoped, tag = 'scoped memory for tpu_custom_call.1']
    #allocation5 [shape = 'u8[16384]{0}', space=vmem, size = 0x4000, scoped, tag = 'output window, operand 0, single buffered']
    %11 = vsyncpa [#allocation3], 0
    %12 = vsyncpa [#allocation4], 0
    // Predicated region
    $region2: #{tpu_custom_call.1} parent=1 // pred_check
      _
    $region3: #{tpu_custom_call.1} parent=1 // pred_check_branch
      %14 = sbr.rel (0) target = $region5
    $region4: #{tpu_custom_call.1} parent=1 // pred_region
      _
    $region5: #{tpu_custom_call.1} parent=1 // pred_fallthru
      _
    // Predicated region
    $region6: #{tpu_custom_call.1} parent=1 // pred_check
      _
    $region7: #{tpu_custom_call.1} parent=1 // pred_check_branch
      %16 = sbr.rel (0) target = $region9
    $region8: #{tpu_custom_call.1} parent=1 // pred_region
      _
    $region9: #{tpu_custom_call.1} parent=1 // pred_fallthru
      _
    // Predicated region
    $region10: #{tpu_custom_call.1} parent=1 // pred_check
      _
    $region11: #{tpu_custom_call.1} parent=1 // pred_check_branch
      %18 = sbr.rel (0) target = $region13
    $region12: #{tpu_custom_call.1} parent=1 // pred_region
      _
    $region13: #{tpu_custom_call.1} parent=1 // pred_fallthru
      _
    // Predicated region
    $region14: #{tpu_custom_call.1} parent=1 // pred_check
      _
    $region15: #{tpu_custom_call.1} parent=1 // pred_check_branch
      %20 = sbr.rel (0) target = $region17
    $region16: #{tpu_custom_call.1} parent=1 // pred_region
      %s22 = ssub.s32 128, 128
      %23 = vsyncadd [#allocation3], %s22
      %s25 = sshll.u32 [#allocation2], 4
      %s26 = int_to_ptr.vmem [resolvable:$true] %s25
      %28 = dma.hbm_to_vmem [thread:$0]  %s3, 128, %s26, [#allocation3]
    $region17: #{tpu_custom_call.1} parent=1 // pred_fallthru
      _
    // Predicated region
    $region18: #{tpu_custom_call.1} parent=1 // pred_check
      _
    $region19: #{tpu_custom_call.1} parent=1 // pred_check_branch
      %30 = sbr.rel (0) target = $region21
    $region20: #{tpu_custom_call.1} parent=1 // pred_region
      _
    $region21: #{tpu_custom_call.1} parent=1 // pred_fallthru
      _
    // Predicated region
    $region22: #{tpu_custom_call.1} parent=1 // pred_check
      _
    $region23: #{tpu_custom_call.1} parent=1 // pred_check_branch
      %32 = sbr.rel (0) target = $region25
    $region24: #{tpu_custom_call.1} parent=1 // pred_region
      _
    $region25: #{tpu_custom_call.1} parent=1 // pred_fallthru
      _
    // Predicated region
    $region26: #{tpu_custom_call.1} parent=1 // pred_check
      _
    $region27: #{tpu_custom_call.1} parent=1 // pred_check_branch
      %34 = sbr.rel (0) target = $region29
    $region28: #{tpu_custom_call.1} parent=1 // pred_region
      %35 = dma.done [#allocation3], 128
    $region29: #{tpu_custom_call.1} parent=1 // pred_fallthru
      _
    %v36 = vld [vmem:[%s1] sm:$0xff]
    %v37 = vld [vmem:[%s2] sm:$0xff]
    %v38 = vld [vmem:[#allocation2] sm:$0xff]
    %v39 = vld [vmem:[%s4] sm:$0xff]
    %v40 = vld [vmem:[%s0] sm:$0xff]
    %42 = vset.pattern.permute.xlu0 0
    %43 = vperm.xlu0 %42, %v37
    %v44 = vpop.permute.xlu0 %43
    %v47 = vcombine.high %v40, %v40
    %vm48 = vcmask 31744
    %v50 = vsel %vm48, %v36, 0
    %vm52 = vcmask 1043456
    %v53 = vsel %vm52, %v40, 0
    %v55 = vsel %vm52, %v47, 0
    %57 = vmatprep.subr.mxu0 %v55
    %58 = vmatpush1.msra.mxu0 %v53
    %59 = vmatprep.subr.mxu0 0.0
    %60 = vmatpush1.msra.mxu0 0.0
    %61 = vmatprep.subr.mxu0 0.0
    %62 = vmatpush1.msra.mxu0 0.0
    %63 = vmatprep.subr.mxu0 0.0
    %64 = vmatpush1.msra.mxu0 0.0
    %65 = vmatprep.subr.mxu0 0.0
    %66 = vmatpush1.msra.mxu0 0.0
    %67 = vmatprep.subr.mxu0 0.0
    %68 = vmatpush1.msra.mxu0 0.0
    %69 = vmatprep.subr.mxu0 0.0
    %70 = vmatpush1.msra.mxu0 0.0
    %71 = vmatprep.subr.mxu0 0.0
    %72 = vmatpush1.msra.mxu0 0.0
    %73 = vmatprep.subr.mxu0 0.0
    %74 = vmatpush1.msra.mxu0 0.0
    %75 = vmatprep.subr.mxu0 0.0
    %76 = vmatpush1.msra.mxu0 0.0
    %77 = vmatprep.subr.mxu0 0.0
    %78 = vmatpush1.msra.mxu0 0.0
    %79 = vmatprep.subr.mxu0 0.0
    %80 = vmatpush1.msra.mxu0 0.0
    %81 = vmatprep.subr.mxu0 0.0
    %82 = vmatpush1.msra.mxu0 0.0
    %83 = vmatprep.subr.mxu0 0.0
    %84 = vmatpush1.msra.mxu0 0.0
    %85 = vmatprep.subr.mxu0 0.0
    %86 = vmatpush1.msra.mxu0 0.0
    %87 = vmatprep.subr.mxu0 0.0
    %88 = vmatpush1.msra.mxu0 0.0
    %89 = vmatprep.subr.mxu0 0.0
    %90 = vmatpush1.msra.mxu0 0.0
    %91 = vmatprep.subr.mxu0 0.0
    %92 = vmatpush1.msra.mxu0 0.0
    %93 = vmatprep.subr.mxu0 0.0
    %94 = vmatpush1.msra.mxu0 0.0
    %95 = vmatprep.subr.mxu0 0.0
    %96 = vmatpush1.msra.mxu0 0.0
    %97 = vmatprep.subr.mxu0 0.0
    %98 = vmatpush1.msra.mxu0 0.0
    %99 = vmatprep.subr.mxu0 0.0
    %100 = vmatpush1.msra.mxu0 0.0
    %101 = vmatprep.subr.mxu0 0.0
    %102 = vmatpush1.msra.mxu0 0.0
    %103 = vmatprep.subr.mxu0 0.0
    %104 = vmatpush1.msra.mxu0 0.0
    %105 = vmatprep.subr.mxu0 0.0
    %106 = vmatpush1.msra.mxu0 0.0
    %107 = vmatprep.subr.mxu0 0.0
    %108 = vmatpush1.msra.mxu0 0.0
    %109 = vmatprep.subr.mxu0 0.0
    %110 = vmatpush1.msra.mxu0 0.0
    %111 = vmatprep.subr.mxu0 0.0
    %112 = vmatpush1.msra.mxu0 0.0
    %113 = vmatprep.subr.mxu0 0.0
    %114 = vmatpush1.msra.mxu0 0.0
    %115 = vmatprep.subr.mxu0 0.0
    %116 = vmatpush1.msra.mxu0 0.0
    %117 = vmatprep.subr.mxu0 0.0
    %118 = vmatpush1.msra.mxu0 0.0
    %119 = vmatprep.subr.mxu0 0.0
    %120 = vmatpush1.msra.mxu0 0.0
    %121 = vmatprep.mubr.f32.mxu0 0.0
    %122 = vmatmul.mubr.f32.gmra.mrb[0].mxu0 %v50
    %v123 = vpop.f32.mrb[0].mxu0
    %v124 = vadd.f32 %v44, %v123
    %v125 = vpop.f32.mrb[0].mxu0
    %v126 = vadd.f32 %v44, %v125
    %127 = vdwg.mxu0
    %129 = vset.pattern.permute.xlu0 4
    %130 = vperm.xlu0 %129, %v38
    %v131 = vpop.permute.xlu0 %130
    %v133 = vmul.f32 %v124, %v131
    %v134 = vmul.f32 %v126, %v131
    %135 = vrot.lane.b32.xlu0 %v124, 17
    %v136 = vpop.permute.xlu0 %135
    %137 = vrot.lane.b32.xlu0 %v126, 17
    %v138 = vpop.permute.xlu0 %137
    %v139 = vlaneseq
    %v140 = vand.u32 %v139, 127
    %vm141 = vcmp.lt.s32.totalorder %v140, 17
    %v142 = vsel %vm141, %v136, %v138
    %v143 = vsel %vm141, %v138, %v136
    %v144 = vld [vmem:[%s5] sm:$0x3]
    %v146 = vlaneseq
    %v147 = vshrl.u32 %v146, 7
    %v148 = vsub.s32 0, %v147
    %v149 = vrot.slane %v144, %v148
    %v150 = vlaneseq
    %v151 = vshrl.u32 %v150, 7
    %v152 = vsub.s32 1, %v151
    %v153 = vrot.slane %v144, %v152
    %v156 = vmul.f32 %v143, %v149
    %v157 = vmul.f32 %v142, %v153
    %158 = vset.pattern.permute.xlu0 0
    %159 = vperm.xlu0 %158, %v38
    %v160 = vpop.permute.xlu0 %159
    %v162 = vmul.f32 %v156, %v160
    %v163 = vmul.f32 %v157, %v160
    %v164 = vadd.f32 %v133, %v162
    %v165 = vadd.f32 %v134, %v163
    %166 = vrot.lane.b32.xlu0 %v124, 16
    %v167 = vpop.permute.xlu0 %166
    %168 = vrot.lane.b32.xlu0 %v126, 16
    %v169 = vpop.permute.xlu0 %168
    %vm170 = vcmp.lt.s32.totalorder %v140, 16
    %v171 = vsel %vm170, %v167, %v169
    %v172 = vsel %vm170, %v169, %v167
    %s173 = scalar_lea.vmem %s5, 2
    %v174 = vld [vmem:[%s173] sm:$0x3]
    %v176 = vlaneseq
    %v177 = vshrl.u32 %v176, 7
    %v178 = vsub.s32 0, %v177
    %v179 = vrot.slane %v174, %v178
    %v180 = vlaneseq
    %v181 = vshrl.u32 %v180, 7
    %v182 = vsub.s32 1, %v181
    %v183 = vrot.slane %v174, %v182
    %v186 = vmul.f32 %v172, %v179
    %v187 = vmul.f32 %v171, %v183
    %188 = vset.pattern.permute.xlu0 1
    %189 = vperm.xlu0 %188, %v38
    %v190 = vpop.permute.xlu0 %189
    %v192 = vmul.f32 %v186, %v190
    %v193 = vmul.f32 %v187, %v190
    %v194 = vadd.f32 %v164, %v192
    %v195 = vadd.f32 %v165, %v193
    %196 = vrot.lane.b32.xlu0 %v124, 15
    %v197 = vpop.permute.xlu0 %196
    %198 = vrot.lane.b32.xlu0 %v126, 15
    %v199 = vpop.permute.xlu0 %198
    %vm200 = vcmp.lt.s32.totalorder %v140, 15
    %v201 = vsel %vm200, %v197, %v199
    %v202 = vsel %vm200, %v199, %v197
    %s203 = scalar_lea.vmem %s5, 4
    %v204 = vld [vmem:[%s203] sm:$0x3]
    %v206 = vlaneseq
    %v207 = vshrl.u32 %v206, 7
    %v208 = vsub.s32 0, %v207
    %v209 = vrot.slane %v204, %v208
    %v210 = vlaneseq
    %v211 = vshrl.u32 %v210, 7
    %v212 = vsub.s32 1, %v211
    %v213 = vrot.slane %v204, %v212
    %v216 = vmul.f32 %v202, %v209
    %v217 = vmul.f32 %v201, %v213
    %218 = vset.pattern.permute.xlu0 2
    %219 = vperm.xlu0 %218, %v38
    %v220 = vpop.permute.xlu0 %219
    %v222 = vmul.f32 %v216, %v220
    %v223 = vmul.f32 %v217, %v220
    %v224 = vadd.f32 %v194, %v222
    %v225 = vadd.f32 %v195, %v223
    %226 = vrot.lane.b32.xlu0 %v124, 1
    %v227 = vpop.permute.xlu0 %226
    %228 = vrot.lane.b32.xlu0 %v126, 1
    %v229 = vpop.permute.xlu0 %228
    %vm230 = vcmp.lt.s32.totalorder %v140, 1
    %v231 = vsel %vm230, %v227, %v229
    %v232 = vsel %vm230, %v229, %v227
    %s233 = scalar_lea.vmem %s5, 6
    %v234 = vld [vmem:[%s233] sm:$0x3]
    %v236 = vlaneseq
    %v237 = vshrl.u32 %v236, 7
    %v238 = vsub.s32 0, %v237
    %v239 = vrot.slane %v234, %v238
    %v240 = vlaneseq
    %v241 = vshrl.u32 %v240, 7
    %v242 = vsub.s32 1, %v241
    %v243 = vrot.slane %v234, %v242
    %v246 = vmul.f32 %v232, %v239
    %v247 = vmul.f32 %v231, %v243
    %248 = vset.pattern.permute.xlu0 3
    %249 = vperm.xlu0 %248, %v38
    %v250 = vpop.permute.xlu0 %249
    %v252 = vmul.f32 %v246, %v250
    %v253 = vmul.f32 %v247, %v250
    %v254 = vadd.f32 %v224, %v252
    %v255 = vadd.f32 %v225, %v253
    %256 = vrot.lane.b32.xlu0 %v124, 127
    %v257 = vpop.permute.xlu0 %256
    %258 = vrot.lane.b32.xlu0 %v126, 127
    %v259 = vpop.permute.xlu0 %258
    %vm260 = vcmp.lt.s32.totalorder %v140, 127
    %v261 = vsel %vm260, %v257, %v259
    %v262 = vsel %vm260, %v259, %v257
    %s263 = scalar_lea.vmem %s5, 10
    %v264 = vld [vmem:[%s263] sm:$0x3]
    %v266 = vlaneseq
    %v267 = vshrl.u32 %v266, 7
    %v268 = vsub.s32 0, %v267
    %v269 = vrot.slane %v264, %v268
    %v270 = vlaneseq
    %v271 = vshrl.u32 %v270, 7
    %v272 = vsub.s32 1, %v271
    %v273 = vrot.slane %v264, %v272
    %v276 = vmul.f32 %v261, %v269
    %v277 = vmul.f32 %v262, %v273
    %278 = vset.pattern.permute.xlu0 5
    %279 = vperm.xlu0 %278, %v38
    %v280 = vpop.permute.xlu0 %279
    %v282 = vmul.f32 %v276, %v280
    %v283 = vmul.f32 %v277, %v280
    %v284 = vadd.f32 %v254, %v282
    %v285 = vadd.f32 %v255, %v283
    %286 = vrot.lane.b32.xlu0 %v124, 113
    %v287 = vpop.permute.xlu0 %286
    %288 = vrot.lane.b32.xlu0 %v126, 113
    %v289 = vpop.permute.xlu0 %288
    %vm290 = vcmp.lt.s32.totalorder %v140, 113
    %v291 = vsel %vm290, %v287, %v289
    %v292 = vsel %vm290, %v289, %v287
    %s293 = scalar_lea.vmem %s5, 12
    %v294 = vld [vmem:[%s293] sm:$0x3]
    %v296 = vlaneseq
    %v297 = vshrl.u32 %v296, 7
    %v298 = vsub.s32 0, %v297
    %v299 = vrot.slane %v294, %v298
    %v300 = vlaneseq
    %v301 = vshrl.u32 %v300, 7
    %v302 = vsub.s32 1, %v301
    %v303 = vrot.slane %v294, %v302
    %v306 = vmul.f32 %v291, %v299
    %v307 = vmul.f32 %v292, %v303
    %308 = vset.pattern.permute.xlu0 6
    %309 = vperm.xlu0 %308, %v38
    %v310 = vpop.permute.xlu0 %309
    %v312 = vmul.f32 %v306, %v310
    %v313 = vmul.f32 %v307, %v310
    %v314 = vadd.f32 %v284, %v312
    %v315 = vadd.f32 %v285, %v313
    %316 = vrot.lane.b32.xlu0 %v124, 112
    %v317 = vpop.permute.xlu0 %316
    %318 = vrot.lane.b32.xlu0 %v126, 112
    %v319 = vpop.permute.xlu0 %318
    %vm320 = vcmp.lt.s32.totalorder %v140, 112
    %v321 = vsel %vm320, %v317, %v319
    %v322 = vsel %vm320, %v319, %v317
    %s323 = scalar_lea.vmem %s5, 14
    %v324 = vld [vmem:[%s323] sm:$0x3]
    %v326 = vlaneseq
    %v327 = vshrl.u32 %v326, 7
    %v328 = vsub.s32 0, %v327
    %v329 = vrot.slane %v324, %v328
    %v330 = vlaneseq
    %v331 = vshrl.u32 %v330, 7
    %v332 = vsub.s32 1, %v331
    %v333 = vrot.slane %v324, %v332
    %v336 = vmul.f32 %v321, %v329
    %v337 = vmul.f32 %v322, %v333
    %338 = vset.pattern.permute.xlu0 7
    %339 = vperm.xlu0 %338, %v38
    %v340 = vpop.permute.xlu0 %339
    %v342 = vmul.f32 %v336, %v340
    %v343 = vmul.f32 %v337, %v340
    %v344 = vadd.f32 %v314, %v342
    %v345 = vadd.f32 %v315, %v343
    %346 = vrot.lane.b32.xlu0 %v124, 111
    %v347 = vpop.permute.xlu0 %346
    %348 = vrot.lane.b32.xlu0 %v126, 111
    %v349 = vpop.permute.xlu0 %348
    %vm350 = vcmp.lt.s32.totalorder %v140, 111
    %v351 = vsel %vm350, %v347, %v349
    %v352 = vsel %vm350, %v349, %v347
    %s353 = scalar_lea.vmem %s5, 16
    %v354 = vld [vmem:[%s353] sm:$0x3]
    %v356 = vlaneseq
    %v357 = vshrl.u32 %v356, 7
    %v358 = vsub.s32 0, %v357
    %v359 = vrot.slane %v354, %v358
    %v360 = vlaneseq
    %v361 = vshrl.u32 %v360, 7
    %v362 = vsub.s32 1, %v361
    %v363 = vrot.slane %v354, %v362
    %v366 = vmul.f32 %v351, %v359
    %v367 = vmul.f32 %v352, %v363
    %368 = vset.pattern.permute.xlu0 8
    %369 = vperm.xlu0 %368, %v38
    %v370 = vpop.permute.xlu0 %369
    %v372 = vmul.f32 %v366, %v370
    %v373 = vmul.f32 %v367, %v370
    %v374 = vadd.f32 %v344, %v372
    %v375 = vadd.f32 %v345, %v373
    %377 = vset.pattern.permute.xlu0 0
    %378 = vperm.xlu0 %377, %v39
    %v379 = vpop.permute.xlu0 %378
    %v381 = vadd.f32 %v374, %v379
    %v382 = vadd.f32 %v375, %v379
    %v383 = vmax.f32 %v381, 0.0
    %v384 = vmax.f32 %v382, 0.0
    %385 = vst [vmem:[#allocation5] sm:$0xff] %v383
    %386 = vst [vmem:[#allocation5 + $0x8] sm:$0xff] %v384
    %s387 = scalar_lea.vmem %s0, 8
    %v388 = vld [vmem:[%s387] sm:$0xff]
    %v390 = vcombine.high %v388, %v388
    %v391 = vsel %vm52, %v388, 0
    %v393 = vsel %vm52, %v390, 0
    %395 = vmatprep.subr.mxu0 %v393
    %396 = vmatpush1.msra.mxu0 %v391
    %397 = vmatprep.subr.mxu0 0.0
    %398 = vmatpush1.msra.mxu0 0.0
    %399 = vmatprep.subr.mxu0 0.0
    %400 = vmatpush1.msra.mxu0 0.0
    %401 = vmatprep.subr.mxu0 0.0
    %402 = vmatpush1.msra.mxu0 0.0
    %403 = vmatprep.subr.mxu0 0.0
    %404 = vmatpush1.msra.mxu0 0.0
    %405 = vmatprep.subr.mxu0 0.0
    %406 = vmatpush1.msra.mxu0 0.0
    %407 = vmatprep.subr.mxu0 0.0
    %408 = vmatpush1.msra.mxu0 0.0
    %409 = vmatprep.subr.mxu0 0.0
    %410 = vmatpush1.msra.mxu0 0.0
    %411 = vmatprep.subr.mxu0 0.0
    %412 = vmatpush1.msra.mxu0 0.0
    %413 = vmatprep.subr.mxu0 0.0
    %414 = vmatpush1.msra.mxu0 0.0
    %415 = vmatprep.subr.mxu0 0.0
    %416 = vmatpush1.msra.mxu0 0.0
    %417 = vmatprep.subr.mxu0 0.0
    %418 = vmatpush1.msra.mxu0 0.0
    %419 = vmatprep.subr.mxu0 0.0
    %420 = vmatpush1.msra.mxu0 0.0
    %421 = vmatprep.subr.mxu0 0.0
    %422 = vmatpush1.msra.mxu0 0.0
    %423 = vmatprep.subr.mxu0 0.0
    %424 = vmatpush1.msra.mxu0 0.0
    %425 = vmatprep.subr.mxu0 0.0
    %426 = vmatpush1.msra.mxu0 0.0
    %427 = vmatprep.subr.mxu0 0.0
    %428 = vmatpush1.msra.mxu0 0.0
    %429 = vmatprep.subr.mxu0 0.0
    %430 = vmatpush1.msra.mxu0 0.0
    %431 = vmatprep.subr.mxu0 0.0
    %432 = vmatpush1.msra.mxu0 0.0
    %433 = vmatprep.subr.mxu0 0.0
    %434 = vmatpush1.msra.mxu0 0.0
    %435 = vmatprep.subr.mxu0 0.0
    %436 = vmatpush1.msra.mxu0 0.0
    %437 = vmatprep.subr.mxu0 0.0
    %438 = vmatpush1.msra.mxu0 0.0
    %439 = vmatprep.subr.mxu0 0.0
    %440 = vmatpush1.msra.mxu0 0.0
    %441 = vmatprep.subr.mxu0 0.0
    %442 = vmatpush1.msra.mxu0 0.0
    %443 = vmatprep.subr.mxu0 0.0
    %444 = vmatpush1.msra.mxu0 0.0
    %445 = vmatprep.subr.mxu0 0.0
    %446 = vmatpush1.msra.mxu0 0.0
    %447 = vmatprep.subr.mxu0 0.0
    %448 = vmatpush1.msra.mxu0 0.0
    %449 = vmatprep.subr.mxu0 0.0
    %450 = vmatpush1.msra.mxu0 0.0
    %451 = vmatprep.subr.mxu0 0.0
    %452 = vmatpush1.msra.mxu0 0.0
    %453 = vmatprep.subr.mxu0 0.0
    %454 = vmatpush1.msra.mxu0 0.0
    %455 = vmatprep.subr.mxu0 0.0
    %456 = vmatpush1.msra.mxu0 0.0
    %457 = vmatprep.subr.mxu0 0.0
    %458 = vmatpush1.msra.mxu0 0.0
    %459 = vmatprep.mubr.f32.mxu0 0.0
    %460 = vmatmul.mubr.f32.gmra.mrb[0].mxu0 %v50
    %v461 = vpop.f32.mrb[0].mxu0
    %v462 = vadd.f32 %v44, %v461
    %v463 = vpop.f32.mrb[0].mxu0
    %v464 = vadd.f32 %v44, %v463
    %465 = vdwg.mxu0
    %v466 = vmul.f32 %v462, %v131
    %v467 = vmul.f32 %v464, %v131
    %468 = vrot.lane.b32.xlu0 %v462, 17
    %v469 = vpop.permute.xlu0 %468
    %470 = vrot.lane.b32.xlu0 %v464, 17
    %v471 = vpop.permute.xlu0 %470
    %v472 = vsel %vm141, %v469, %v471
    %v473 = vsel %vm141, %v471, %v469
    %v474 = vld [vmem:[%s5] sm:$0x3]
    %v476 = vlaneseq
    %v477 = vshrl.u32 %v476, 7
    %v478 = vsub.s32 0, %v477
    %v479 = vrot.slane %v474, %v478
    %v480 = vlaneseq
    %v481 = vshrl.u32 %v480, 7
    %v482 = vsub.s32 1, %v481
    %v483 = vrot.slane %v474, %v482
    %v486 = vmul.f32 %v473, %v479
    %v487 = vmul.f32 %v472, %v483
    %v488 = vmul.f32 %v486, %v160
    %v489 = vmul.f32 %v487, %v160
    %v490 = vadd.f32 %v466, %v488
    %v491 = vadd.f32 %v467, %v489
    %492 = vrot.lane.b32.xlu0 %v462, 16
    %v493 = vpop.permute.xlu0 %492
    %494 = vrot.lane.b32.xlu0 %v464, 16
    %v495 = vpop.permute.xlu0 %494
    %v496 = vsel %vm170, %v493, %v495
    %v497 = vsel %vm170, %v495, %v493
    %v498 = vld [vmem:[%s173] sm:$0x3]
    %v500 = vlaneseq
    %v501 = vshrl.u32 %v500, 7
    %v502 = vsub.s32 0, %v501
    %v503 = vrot.slane %v498, %v502
    %v504 = vlaneseq
    %v505 = vshrl.u32 %v504, 7
    %v506 = vsub.s32 1, %v505
    %v507 = vrot.slane %v498, %v506
    %v510 = vmul.f32 %v497, %v503
    %v511 = vmul.f32 %v496, %v507
    %v512 = vmul.f32 %v510, %v190
    %v513 = vmul.f32 %v511, %v190
    %v514 = vadd.f32 %v490, %v512
    %v515 = vadd.f32 %v491, %v513
    %516 = vrot.lane.b32.xlu0 %v462, 15
    %v517 = vpop.permute.xlu0 %516
    %518 = vrot.lane.b32.xlu0 %v464, 15
    %v519 = vpop.permute.xlu0 %518
    %v520 = vsel %vm200, %v517, %v519
    %v521 = vsel %vm200, %v519, %v517
    %v522 = vld [vmem:[%s203] sm:$0x3]
    %v524 = vlaneseq
    %v525 = vshrl.u32 %v524, 7
    %v526 = vsub.s32 0, %v525
    %v527 = vrot.slane %v522, %v526
    %v528 = vlaneseq
    %v529 = vshrl.u32 %v528, 7
    %v530 = vsub.s32 1, %v529
    %v531 = vrot.slane %v522, %v530
    %v534 = vmul.f32 %v521, %v527
    %v535 = vmul.f32 %v520, %v531
    %v536 = vmul.f32 %v534, %v220
    %v537 = vmul.f32 %v535, %v220
    %v538 = vadd.f32 %v514, %v536
    %v539 = vadd.f32 %v515, %v537
    %540 = vrot.lane.b32.xlu0 %v462, 1
    %v541 = vpop.permute.xlu0 %540
    %542 = vrot.lane.b32.xlu0 %v464, 1
    %v543 = vpop.permute.xlu0 %542
    %v544 = vsel %vm230, %v541, %v543
    %v545 = vsel %vm230, %v543, %v541
    %v546 = vld [vmem:[%s233] sm:$0x3]
    %v548 = vlaneseq
    %v549 = vshrl.u32 %v548, 7
    %v550 = vsub.s32 0, %v549
    %v551 = vrot.slane %v546, %v550
    %v552 = vlaneseq
    %v553 = vshrl.u32 %v552, 7
    %v554 = vsub.s32 1, %v553
    %v555 = vrot.slane %v546, %v554
    %v558 = vmul.f32 %v545, %v551
    %v559 = vmul.f32 %v544, %v555
    %v560 = vmul.f32 %v558, %v250
    %v561 = vmul.f32 %v559, %v250
    %v562 = vadd.f32 %v538, %v560
    %v563 = vadd.f32 %v539, %v561
    %564 = vrot.lane.b32.xlu0 %v462, 127
    %v565 = vpop.permute.xlu0 %564
    %566 = vrot.lane.b32.xlu0 %v464, 127
    %v567 = vpop.permute.xlu0 %566
    %v568 = vsel %vm260, %v565, %v567
    %v569 = vsel %vm260, %v567, %v565
    %v570 = vld [vmem:[%s263] sm:$0x3]
    %v572 = vlaneseq
    %v573 = vshrl.u32 %v572, 7
    %v574 = vsub.s32 0, %v573
    %v575 = vrot.slane %v570, %v574
    %v576 = vlaneseq
    %v577 = vshrl.u32 %v576, 7
    %v578 = vsub.s32 1, %v577
    %v579 = vrot.slane %v570, %v578
    %v582 = vmul.f32 %v568, %v575
    %v583 = vmul.f32 %v569, %v579
    %v584 = vmul.f32 %v582, %v280
    %v585 = vmul.f32 %v583, %v280
    %v586 = vadd.f32 %v562, %v584
    %v587 = vadd.f32 %v563, %v585
    %588 = vrot.lane.b32.xlu0 %v462, 113
    %v589 = vpop.permute.xlu0 %588
    %590 = vrot.lane.b32.xlu0 %v464, 113
    %v591 = vpop.permute.xlu0 %590
    %v592 = vsel %vm290, %v589, %v591
    %v593 = vsel %vm290, %v591, %v589
    %v594 = vld [vmem:[%s293] sm:$0x3]
    %v596 = vlaneseq
    %v597 = vshrl.u32 %v596, 7
    %v598 = vsub.s32 0, %v597
    %v599 = vrot.slane %v594, %v598
    %v600 = vlaneseq
    %v601 = vshrl.u32 %v600, 7
    %v602 = vsub.s32 1, %v601
    %v603 = vrot.slane %v594, %v602
    %v606 = vmul.f32 %v592, %v599
    %v607 = vmul.f32 %v593, %v603
    %v608 = vmul.f32 %v606, %v310
    %v609 = vmul.f32 %v607, %v310
    %v610 = vadd.f32 %v586, %v608
    %v611 = vadd.f32 %v587, %v609
    %612 = vrot.lane.b32.xlu0 %v462, 112
    %v613 = vpop.permute.xlu0 %612
    %614 = vrot.lane.b32.xlu0 %v464, 112
    %v615 = vpop.permute.xlu0 %614
    %v616 = vsel %vm320, %v613, %v615
    %v617 = vsel %vm320, %v615, %v613
    %v618 = vld [vmem:[%s323] sm:$0x3]
    %v620 = vlaneseq
    %v621 = vshrl.u32 %v620, 7
    %v622 = vsub.s32 0, %v621
    %v623 = vrot.slane %v618, %v622
    %v624 = vlaneseq
    %v625 = vshrl.u32 %v624, 7
    %v626 = vsub.s32 1, %v625
    %v627 = vrot.slane %v618, %v626
    %v630 = vmul.f32 %v616, %v623
    %v631 = vmul.f32 %v617, %v627
    %v632 = vmul.f32 %v630, %v340
    %v633 = vmul.f32 %v631, %v340
    %v634 = vadd.f32 %v610, %v632
    %v635 = vadd.f32 %v611, %v633
    %636 = vrot.lane.b32.xlu0 %v462, 111
    %v637 = vpop.permute.xlu0 %636
    %638 = vrot.lane.b32.xlu0 %v464, 111
    %v639 = vpop.permute.xlu0 %638
    %v640 = vsel %vm350, %v637, %v639
    %v641 = vsel %vm350, %v639, %v637
    %v642 = vld [vmem:[%s353] sm:$0x3]
    %v644 = vlaneseq
    %v645 = vshrl.u32 %v644, 7
    %v646 = vsub.s32 0, %v645
    %v647 = vrot.slane %v642, %v646
    %v648 = vlaneseq
    %v649 = vshrl.u32 %v648, 7
    %v650 = vsub.s32 1, %v649
    %v651 = vrot.slane %v642, %v650
    %v654 = vmul.f32 %v640, %v647
    %v655 = vmul.f32 %v641, %v651
    %v656 = vmul.f32 %v654, %v370
    %v657 = vmul.f32 %v655, %v370
    %v658 = vadd.f32 %v634, %v656
    %v659 = vadd.f32 %v635, %v657
    %v660 = vadd.f32 %v658, %v379
    %v661 = vadd.f32 %v659, %v379
    %v662 = vmax.f32 %v660, 0.0
    %v663 = vmax.f32 %v661, 0.0
    %s664 = scalar_lea.vmem [#allocation5], 16
    %665 = vst [vmem:[%s664] sm:$0xff] %v662
    %666 = vst [vmem:[%s664 + $0x8] sm:$0xff] %v663
    // Predicated region
    $region30: #{tpu_custom_call.1} parent=1 // pred_check
      _
    $region31: #{tpu_custom_call.1} parent=1 // pred_check_branch
      %668 = sbr.rel (0) target = $region33
    $region32: #{tpu_custom_call.1} parent=1 // pred_region
      %s670 = ssub.s32 512, 512
      %671 = vsyncadd [#allocation4], %s670
      %s672 = sshll.u32 [#allocation5], 4
      %s673 = int_to_ptr.vmem [resolvable:$true] %s672
      %678 = dma.vmem_to_hbm [thread:$0]  %s673, 512, %s6, [#allocation4], 256, 256, 16
    $region33: #{tpu_custom_call.1} parent=1 // pred_fallthru
      _
    // Predicated region
    $region34: #{tpu_custom_call.1} parent=1 // pred_check
      _
    $region35: #{tpu_custom_call.1} parent=1 // pred_check_branch
      %680 = sbr.rel (0) target = $region37
    $region36: #{tpu_custom_call.1} parent=1 // pred_region
      %681 = dma.done [#allocation4], 512
    $region37: #{tpu_custom_call.1} parent=1 // pred_fallthru
      _
    %682 = vsyncpa [#allocation3], 1
    %683 = vsyncpa [#allocation4], 1

</llo_original>
